<compile_context>
chip_gen: v5e
topology: v5e:2x2
jax: 0.10.0
libtpu: 0.0.40
codegen_flags: <defaults>
</compile_context>

<pallas_src>
import jax
import jax.numpy as jnp
from jax.experimental import pallas as pl
from jax.experimental.pallas import tpu as pltpu

# ---------------------------------------------------------------------------
# Small test shapes consistent with the module
# ---------------------------------------------------------------------------
B = 2              # batch
N = 16             # tokens (sequence)
C = 32             # in_features / out_features
H = 128            # hidden_features (lane-aligned)
R = int(C * 0.25)  # BiAttn reduce_channels = 8
LN_EPS = 1e-5      # nn.LayerNorm default


def _gelu(v):
    # exact (erf) GELU, matching nn.GELU default
    return 0.5 * v * (1.0 + jax.lax.erf(v * 0.7071067811865476))


# ---------------------------------------------------------------------------
# Fused kernel: one grid step == one batch element, everything stays in VMEM
# ---------------------------------------------------------------------------
def biattn_mlp_kernel(x_ref,
                      fc1_w_ref, fc1_b_ref,
                      fc2_w_ref, fc2_b_ref,
                      ln_g_ref, ln_b_ref,
                      gr_w_ref, gr_b_ref,
                      lr_w_ref, lr_b_ref,
                      cs_w_ref, cs_b_ref,
                      ss_wl_ref, ss_wg_ref, ss_b_ref,
                      out_ref):
    x = x_ref[0]                                                        # (N, C)

    # ---- MLP: fc1 -> GELU -> (dropout = identity) -> fc2 ----
    h = jnp.dot(x, fc1_w_ref[...], preferred_element_type=jnp.float32) + fc1_b_ref[...]
    h = _gelu(h)                                                        # (N, H)
    y = jnp.dot(h, fc2_w_ref[...], preferred_element_type=jnp.float32) + fc2_b_ref[...]
    # y == ori_x for BiAttn, shape (N, C)

    # ---- BiAttn ----
    # LayerNorm over channels
    mu = jnp.mean(y, axis=-1, keepdims=True)
    var = jnp.mean(jnp.square(y - mu), axis=-1, keepdims=True)
    xn = (y - mu) * jax.lax.rsqrt(var + LN_EPS) * ln_g_ref[...] + ln_b_ref[...]

    # global branch: mean over tokens -> global_reduce -> GELU
    xg = jnp.mean(xn, axis=0, keepdims=True)                            # (1, C)
    xg = _gelu(jnp.dot(xg, gr_w_ref[...],
                       preferred_element_type=jnp.float32) + gr_b_ref[...])   # (1, R)

    # local branch: local_reduce -> GELU
    xl = _gelu(jnp.dot(xn, lr_w_ref[...],
                       preferred_element_type=jnp.float32) + lr_b_ref[...])   # (N, R)

    # channel gate: channel_select(global) -> sigmoid
    c_attn = jax.nn.sigmoid(
        jnp.dot(xg, cs_w_ref[...], preferred_element_type=jnp.float32) + cs_b_ref[...])  # (1, C)

    # spatial gate: spatial_select(cat([x_local, x_global])) -> sigmoid.
    # cat([xl, xg]) @ W  ==  xl @ W[:R] + xg @ W[R:]; done as a VPU
    # multiply-reduce to avoid a width-1 MXU matmul.
    s_logit = (jnp.sum(xl * ss_wl_ref[...], axis=-1, keepdims=True)      # (N, 1)
               + jnp.sum(xg * ss_wg_ref[...], axis=-1, keepdims=True)    # (1, 1)
               + ss_b_ref[...])                                          # (1, 1)
    s_attn = jax.nn.sigmoid(s_logit)                                     # (N, 1)

    out_ref[0] = y * (c_attn * s_attn)                                   # (N, C)


def biattn_mlp_forward(params, x):
    """x: (B, N, C) -> (B, N, C).  Single fused pallas_call."""
    B_, N_, C_ = x.shape

    def row(v):
        return v.reshape(1, -1).astype(jnp.float32)

    ss_w = params["ss_w"].astype(jnp.float32)                 # (2R, 1)
    args = (
        x.astype(jnp.float32),
        params["fc1_w"].astype(jnp.float32), row(params["fc1_b"]),
        params["fc2_w"].astype(jnp.float32), row(params["fc2_b"]),
        row(params["ln_g"]), row(params["ln_b"]),
        params["gr_w"].astype(jnp.float32), row(params["gr_b"]),
        params["lr_w"].astype(jnp.float32), row(params["lr_b"]),
        params["cs_w"].astype(jnp.float32), row(params["cs_b"]),
        ss_w[:R, 0].reshape(1, R),                            # weights for x_local
        ss_w[R:, 0].reshape(1, R),                            # weights for x_global
        params["ss_b"].reshape(1, 1).astype(jnp.float32),
    )

    in_specs = [pl.BlockSpec((1, N_, C_), lambda b: (b, 0, 0))]
    # all parameters are small 2-D arrays: full block, constant index
    # (resident across grid steps, no re-DMA)
    in_specs += [pl.BlockSpec(a.shape, lambda b: (0, 0)) for a in args[1:]]

    return pl.pallas_call(
        biattn_mlp_kernel,
        out_shape=jax.ShapeDtypeStruct((B_, N_, C_), jnp.float32),
        grid=(B_,),
        in_specs=in_specs,
        out_specs=pl.BlockSpec((1, N_, C_), lambda b: (b, 0, 0)),
        compiler_params=pltpu.CompilerParams(
            dimension_semantics=("parallel",),   # megacore split on v7x; no-op on v5e/v6e
            vmem_limit_bytes=32 * 1024 * 1024,
        ),
    )(*args)


# ---------------------------------------------------------------------------
# Deterministic synthetic parameters + pure-JAX reference for verification
# ---------------------------------------------------------------------------
def init_params(key):
    keys = jax.random.split(key, 14)

    def nrm(k, shape, s=0.1):
        return s * jax.random.normal(k, shape, jnp.float32)

    return dict(
        fc1_w=nrm(keys[0], (C, H)),        fc1_b=nrm(keys[1], (H,), 0.02),
        fc2_w=nrm(keys[2], (H, C)),        fc2_b=nrm(keys[3], (C,), 0.02),
        ln_g=1.0 + nrm(keys[4], (C,)),     ln_b=nrm(keys[5], (C,)),
        gr_w=nrm(keys[6], (C, R)),         gr_b=nrm(keys[7], (R,), 0.02),
        lr_w=nrm(keys[8], (C, R)),         lr_b=nrm(keys[9], (R,), 0.02),
        cs_w=nrm(keys[10], (R, C)),        cs_b=nrm(keys[11], (C,), 0.02),
        ss_w=nrm(keys[12], (2 * R, 1)),    ss_b=nrm(keys[13], (1,), 0.02),
    )


def reference_forward(p, x):
    """Pure-JAX reference mirroring the PyTorch BiAttnMlp forward (eval mode)."""
    h = _gelu(x @ p["fc1_w"] + p["fc1_b"])
    y = h @ p["fc2_w"] + p["fc2_b"]                                      # ori_x
    mu = jnp.mean(y, axis=-1, keepdims=True)
    var = jnp.mean(jnp.square(y - mu), axis=-1, keepdims=True)
    xn = (y - mu) * jax.lax.rsqrt(var + LN_EPS) * p["ln_g"] + p["ln_b"]
    xg = jnp.mean(xn, axis=1, keepdims=True)                             # (B, 1, C)
    xg = _gelu(xg @ p["gr_w"] + p["gr_b"])                               # (B, 1, R)
    xl = _gelu(xn @ p["lr_w"] + p["lr_b"])                               # (B, N, R)
    c_attn = jax.nn.sigmoid(xg @ p["cs_w"] + p["cs_b"])                  # (B, 1, C)
    cat = jnp.concatenate([xl, jnp.broadcast_to(xg, xl.shape)], axis=-1)
    s_attn = jax.nn.sigmoid(cat @ p["ss_w"] + p["ss_b"])                 # (B, N, 1)
    return y * (c_attn * s_attn)


# ---------------------------------------------------------------------------
if __name__ == "__main__":
    key = jax.random.PRNGKey(0)
    pkey, xkey = jax.random.split(key)
    params = init_params(pkey)
    x = jax.random.normal(xkey, (B, N, C), jnp.float32)

    out = jax.jit(biattn_mlp_forward)(params, x)
    out = jax.block_until_ready(out)

    ref = reference_forward(params, x)

    assert out.shape == (B, N, C)
    assert bool(jnp.all(jnp.isfinite(out)))
    assert bool(jnp.allclose(out, ref, atol=1e-4, rtol=1e-4)), \
        float(jnp.max(jnp.abs(out - ref)))
    print("KERNEL_OK")
</pallas_src>

<mosaic_0001>
module attributes {stable_mosaic.version = 11 : i64} {
  func.func @biattn_mlp_kernel(%arg0: i32, %arg1: memref<1x16x32xf32, #tpu.memory_space<vmem>>, %arg2: memref<32x128xf32, #tpu.memory_space<vmem>>, %arg3: memref<1x128xf32, #tpu.memory_space<vmem>>, %arg4: memref<128x32xf32, #tpu.memory_space<vmem>>, %arg5: memref<1x32xf32, #tpu.memory_space<vmem>>, %arg6: memref<1x32xf32, #tpu.memory_space<vmem>>, %arg7: memref<1x32xf32, #tpu.memory_space<vmem>>, %arg8: memref<32x8xf32, #tpu.memory_space<vmem>>, %arg9: memref<1x8xf32, #tpu.memory_space<vmem>>, %arg10: memref<32x8xf32, #tpu.memory_space<vmem>>, %arg11: memref<1x8xf32, #tpu.memory_space<vmem>>, %arg12: memref<8x32xf32, #tpu.memory_space<vmem>>, %arg13: memref<1x32xf32, #tpu.memory_space<vmem>>, %arg14: memref<1x8xf32, #tpu.memory_space<vmem>>, %arg15: memref<1x8xf32, #tpu.memory_space<vmem>>, %arg16: memref<1x1xf32, #tpu.memory_space<vmem>>, %arg17: memref<1x16x32xf32, #tpu.memory_space<vmem>>) attributes {dimension_semantics = [#tpu.dimension_semantics<parallel>], iteration_bounds = array<i64: 2>, scalar_prefetch = 0 : i64, scratch_operands = 0 : i64, tpu.core_type = #tpu.core_type<tc>, window_params = [{transform_indices = @transform_0, window_bounds = array<i64: 1, 16, 32>}, {pipeline_mode = #tpu.pipeline_mode<synchronous>, transform_indices = @transform_1, window_bounds = array<i64: 32, 128>}, {pipeline_mode = #tpu.pipeline_mode<synchronous>, transform_indices = @transform_2, window_bounds = array<i64: 1, 128>}, {pipeline_mode = #tpu.pipeline_mode<synchronous>, transform_indices = @transform_3, window_bounds = array<i64: 128, 32>}, {pipeline_mode = #tpu.pipeline_mode<synchronous>, transform_indices = @transform_4, window_bounds = array<i64: 1, 32>}, {pipeline_mode = #tpu.pipeline_mode<synchronous>, transform_indices = @transform_5, window_bounds = array<i64: 1, 32>}, {pipeline_mode = #tpu.pipeline_mode<synchronous>, transform_indices = @transform_6, window_bounds = array<i64: 1, 32>}, {pipeline_mode = #tpu.pipeline_mode<synchronous>, transform_indices = @transform_7, window_bounds = array<i64: 32, 8>}, {pipeline_mode = #tpu.pipeline_mode<synchronous>, transform_indices = @transform_8, window_bounds = array<i64: 1, 8>}, {pipeline_mode = #tpu.pipeline_mode<synchronous>, transform_indices = @transform_9, window_bounds = array<i64: 32, 8>}, {pipeline_mode = #tpu.pipeline_mode<synchronous>, transform_indices = @transform_10, window_bounds = array<i64: 1, 8>}, {pipeline_mode = #tpu.pipeline_mode<synchronous>, transform_indices = @transform_11, window_bounds = array<i64: 8, 32>}, {pipeline_mode = #tpu.pipeline_mode<synchronous>, transform_indices = @transform_12, window_bounds = array<i64: 1, 32>}, {pipeline_mode = #tpu.pipeline_mode<synchronous>, transform_indices = @transform_13, window_bounds = array<i64: 1, 8>}, {pipeline_mode = #tpu.pipeline_mode<synchronous>, transform_indices = @transform_14, window_bounds = array<i64: 1, 8>}, {pipeline_mode = #tpu.pipeline_mode<synchronous>, transform_indices = @transform_15, window_bounds = array<i64: 1, 1>}, {transform_indices = @transform_16, window_bounds = array<i64: 1, 16, 32>}]} {
    %c0 = arith.constant 0 : index
    %c0_0 = arith.constant 0 : index
    %c0_1 = arith.constant 0 : index
    %0 = vector.load %arg1[%c0, %c0_0, %c0_1] : memref<1x16x32xf32, #tpu.memory_space<vmem>>, vector<1x16x32xf32>
    %1 = vector.shape_cast %0 : vector<1x16x32xf32> to vector<16x32xf32>
    %c0_2 = arith.constant 0 : index
    %c0_3 = arith.constant 0 : index
    %2 = vector.load %arg2[%c0_2, %c0_3] : memref<32x128xf32, #tpu.memory_space<vmem>>, vector<32x128xf32>
    %cst = arith.constant dense<0.000000e+00> : vector<16x128xf32>
    %3 = tpu.matmul %1, %2, %cst {dimension_numbers = #tpu.dot_dimension_numbers<[1], [0], [0], [1], [0, 0, 1, 1], [], []>} : vector<16x32xf32>, vector<32x128xf32>, vector<16x128xf32> -> vector<16x128xf32>
    %c0_4 = arith.constant 0 : index
    %c0_5 = arith.constant 0 : index
    %4 = vector.load %arg3[%c0_4, %c0_5] : memref<1x128xf32, #tpu.memory_space<vmem>>, vector<1x128xf32>
    %5 = vector.broadcast %4 : vector<1x128xf32> to vector<16x128xf32>
    %6 = arith.addf %3, %5 : vector<16x128xf32>
    %cst_6 = arith.constant 5.000000e-01 : f32
    %7 = vector.broadcast %cst_6 : f32 to vector<16x128xf32>
    %8 = arith.mulf %7, %6 : vector<16x128xf32>
    %cst_7 = arith.constant 0.707106769 : f32
    %9 = vector.broadcast %cst_7 : f32 to vector<16x128xf32>
    %10 = arith.mulf %6, %9 : vector<16x128xf32>
    %11 = math.erf %10 : vector<16x128xf32>
    %cst_8 = arith.constant 1.000000e+00 : f32
    %12 = vector.broadcast %cst_8 : f32 to vector<16x128xf32>
    %13 = arith.addf %12, %11 : vector<16x128xf32>
    %14 = arith.mulf %8, %13 : vector<16x128xf32>
    %c0_9 = arith.constant 0 : index
    %c0_10 = arith.constant 0 : index
    %15 = vector.load %arg4[%c0_9, %c0_10] : memref<128x32xf32, #tpu.memory_space<vmem>>, vector<128x32xf32>
    %cst_11 = arith.constant dense<0.000000e+00> : vector<16x32xf32>
    %16 = tpu.matmul %14, %15, %cst_11 {dimension_numbers = #tpu.dot_dimension_numbers<[1], [0], [0], [1], [0, 0, 1, 1], [], []>} : vector<16x128xf32>, vector<128x32xf32>, vector<16x32xf32> -> vector<16x32xf32>
    %c0_12 = arith.constant 0 : index
    %c0_13 = arith.constant 0 : index
    %17 = vector.load %arg5[%c0_12, %c0_13] : memref<1x32xf32, #tpu.memory_space<vmem>>, vector<1x32xf32>
    %18 = vector.broadcast %17 : vector<1x32xf32> to vector<16x32xf32>
    %19 = arith.addf %16, %18 : vector<16x32xf32>
    %cst_14 = arith.constant dense<0.000000e+00> : vector<16xf32>
    %20 = vector.multi_reduction <add>, %19, %cst_14 [1] : vector<16x32xf32> to vector<16xf32>
    %21 = vector.shape_cast %20 : vector<16xf32> to vector<16x1xf32>
    %cst_15 = arith.constant 3.200000e+01 : f32
    %22 = vector.broadcast %cst_15 : f32 to vector<16x1xf32>
    %23 = arith.divf %21, %22 : vector<16x1xf32>
    %24 = vector.broadcast %23 : vector<16x1xf32> to vector<16x32xf32>
    %25 = arith.subf %19, %24 : vector<16x32xf32>
    %26 = arith.mulf %25, %25 : vector<16x32xf32>
    %cst_16 = arith.constant dense<0.000000e+00> : vector<16xf32>
    %27 = vector.multi_reduction <add>, %26, %cst_16 [1] : vector<16x32xf32> to vector<16xf32>
    %28 = vector.shape_cast %27 : vector<16xf32> to vector<16x1xf32>
    %cst_17 = arith.constant 3.200000e+01 : f32
    %29 = vector.broadcast %cst_17 : f32 to vector<16x1xf32>
    %30 = arith.divf %28, %29 : vector<16x1xf32>
    %31 = vector.broadcast %23 : vector<16x1xf32> to vector<16x32xf32>
    %32 = arith.subf %19, %31 : vector<16x32xf32>
    %cst_18 = arith.constant 9.99999974E-6 : f32
    %33 = vector.broadcast %cst_18 : f32 to vector<16x1xf32>
    %34 = arith.addf %30, %33 : vector<16x1xf32>
    %35 = math.rsqrt %34 : vector<16x1xf32>
    %36 = vector.broadcast %35 : vector<16x1xf32> to vector<16x32xf32>
    %37 = arith.mulf %32, %36 : vector<16x32xf32>
    %c0_19 = arith.constant 0 : index
    %c0_20 = arith.constant 0 : index
    %38 = vector.load %arg6[%c0_19, %c0_20] : memref<1x32xf32, #tpu.memory_space<vmem>>, vector<1x32xf32>
    %39 = vector.broadcast %38 : vector<1x32xf32> to vector<16x32xf32>
    %40 = arith.mulf %37, %39 : vector<16x32xf32>
    %c0_21 = arith.constant 0 : index
    %c0_22 = arith.constant 0 : index
    %41 = vector.load %arg7[%c0_21, %c0_22] : memref<1x32xf32, #tpu.memory_space<vmem>>, vector<1x32xf32>
    %42 = vector.broadcast %41 : vector<1x32xf32> to vector<16x32xf32>
    %43 = arith.addf %40, %42 : vector<16x32xf32>
    %cst_23 = arith.constant dense<0.000000e+00> : vector<32xf32>
    %44 = vector.multi_reduction <add>, %43, %cst_23 [0] : vector<16x32xf32> to vector<32xf32>
    %45 = vector.shape_cast %44 : vector<32xf32> to vector<1x32xf32>
    %cst_24 = arith.constant 1.600000e+01 : f32
    %46 = vector.broadcast %cst_24 : f32 to vector<1x32xf32>
    %47 = arith.divf %45, %46 : vector<1x32xf32>
    %c0_25 = arith.constant 0 : index
    %c0_26 = arith.constant 0 : index
    %48 = vector.load %arg8[%c0_25, %c0_26] : memref<32x8xf32, #tpu.memory_space<vmem>>, vector<32x8xf32>
    %cst_27 = arith.constant dense<0.000000e+00> : vector<1x8xf32>
    %49 = tpu.matmul %47, %48, %cst_27 {dimension_numbers = #tpu.dot_dimension_numbers<[1], [0], [0], [1], [0, 0, 1, 1], [], []>} : vector<1x32xf32>, vector<32x8xf32>, vector<1x8xf32> -> vector<1x8xf32>
    %c0_28 = arith.constant 0 : index
    %c0_29 = arith.constant 0 : index
    %50 = vector.load %arg9[%c0_28, %c0_29] : memref<1x8xf32, #tpu.memory_space<vmem>>, vector<1x8xf32>
    %51 = arith.addf %49, %50 : vector<1x8xf32>
    %cst_30 = arith.constant 5.000000e-01 : f32
    %52 = vector.broadcast %cst_30 : f32 to vector<1x8xf32>
    %53 = arith.mulf %52, %51 : vector<1x8xf32>
    %cst_31 = arith.constant 0.707106769 : f32
    %54 = vector.broadcast %cst_31 : f32 to vector<1x8xf32>
    %55 = arith.mulf %51, %54 : vector<1x8xf32>
    %56 = math.erf %55 : vector<1x8xf32>
    %cst_32 = arith.constant 1.000000e+00 : f32
    %57 = vector.broadcast %cst_32 : f32 to vector<1x8xf32>
    %58 = arith.addf %57, %56 : vector<1x8xf32>
    %59 = arith.mulf %53, %58 : vector<1x8xf32>
    %c0_33 = arith.constant 0 : index
    %c0_34 = arith.constant 0 : index
    %60 = vector.load %arg10[%c0_33, %c0_34] : memref<32x8xf32, #tpu.memory_space<vmem>>, vector<32x8xf32>
    %cst_35 = arith.constant dense<0.000000e+00> : vector<16x8xf32>
    %61 = tpu.matmul %43, %60, %cst_35 {dimension_numbers = #tpu.dot_dimension_numbers<[1], [0], [0], [1], [0, 0, 1, 1], [], []>} : vector<16x32xf32>, vector<32x8xf32>, vector<16x8xf32> -> vector<16x8xf32>
    %c0_36 = arith.constant 0 : index
    %c0_37 = arith.constant 0 : index
    %62 = vector.load %arg11[%c0_36, %c0_37] : memref<1x8xf32, #tpu.memory_space<vmem>>, vector<1x8xf32>
    %63 = vector.broadcast %62 : vector<1x8xf32> to vector<16x8xf32>
    %64 = arith.addf %61, %63 : vector<16x8xf32>
    %cst_38 = arith.constant 5.000000e-01 : f32
    %65 = vector.broadcast %cst_38 : f32 to vector<16x8xf32>
    %66 = arith.mulf %65, %64 : vector<16x8xf32>
    %cst_39 = arith.constant 0.707106769 : f32
    %67 = vector.broadcast %cst_39 : f32 to vector<16x8xf32>
    %68 = arith.mulf %64, %67 : vector<16x8xf32>
    %69 = math.erf %68 : vector<16x8xf32>
    %cst_40 = arith.constant 1.000000e+00 : f32
    %70 = vector.broadcast %cst_40 : f32 to vector<16x8xf32>
    %71 = arith.addf %70, %69 : vector<16x8xf32>
    %72 = arith.mulf %66, %71 : vector<16x8xf32>
    %c0_41 = arith.constant 0 : index
    %c0_42 = arith.constant 0 : index
    %73 = vector.load %arg12[%c0_41, %c0_42] : memref<8x32xf32, #tpu.memory_space<vmem>>, vector<8x32xf32>
    %cst_43 = arith.constant dense<0.000000e+00> : vector<1x32xf32>
    %74 = tpu.matmul %59, %73, %cst_43 {dimension_numbers = #tpu.dot_dimension_numbers<[1], [0], [0], [1], [0, 0, 1, 1], [], []>} : vector<1x8xf32>, vector<8x32xf32>, vector<1x32xf32> -> vector<1x32xf32>
    %c0_44 = arith.constant 0 : index
    %c0_45 = arith.constant 0 : index
    %75 = vector.load %arg13[%c0_44, %c0_45] : memref<1x32xf32, #tpu.memory_space<vmem>>, vector<1x32xf32>
    %76 = arith.addf %74, %75 : vector<1x32xf32>
    %77 = arith.negf %76 : vector<1x32xf32>
    %78 = math.exp %77 : vector<1x32xf32>
    %cst_46 = arith.constant 1.000000e+00 : f32
    %79 = vector.broadcast %cst_46 : f32 to vector<1x32xf32>
    %80 = arith.addf %79, %78 : vector<1x32xf32>
    %81 = arith.divf %79, %80 : vector<1x32xf32>
    %c0_47 = arith.constant 0 : index
    %c0_48 = arith.constant 0 : index
    %82 = vector.load %arg14[%c0_47, %c0_48] : memref<1x8xf32, #tpu.memory_space<vmem>>, vector<1x8xf32>
    %83 = vector.broadcast %82 : vector<1x8xf32> to vector<16x8xf32>
    %84 = arith.mulf %72, %83 : vector<16x8xf32>
    %cst_49 = arith.constant dense<0.000000e+00> : vector<16xf32>
    %85 = vector.multi_reduction <add>, %84, %cst_49 [1] : vector<16x8xf32> to vector<16xf32>
    %86 = vector.shape_cast %85 : vector<16xf32> to vector<16x1xf32>
    %c0_50 = arith.constant 0 : index
    %c0_51 = arith.constant 0 : index
    %87 = vector.load %arg15[%c0_50, %c0_51] : memref<1x8xf32, #tpu.memory_space<vmem>>, vector<1x8xf32>
    %88 = arith.mulf %59, %87 : vector<1x8xf32>
    %cst_52 = arith.constant dense<0.000000e+00> : vector<1xf32>
    %89 = vector.multi_reduction <add>, %88, %cst_52 [1] : vector<1x8xf32> to vector<1xf32>
    %90 = vector.shape_cast %89 : vector<1xf32> to vector<1x1xf32>
    %91 = vector.broadcast %90 : vector<1x1xf32> to vector<16x1xf32>
    %92 = arith.addf %86, %91 : vector<16x1xf32>
    %c0_53 = arith.constant 0 : index
    %c0_54 = arith.constant 0 : index
    %93 = vector.load %arg16[%c0_53, %c0_54] : memref<1x1xf32, #tpu.memory_space<vmem>>, vector<1x1xf32>
    %94 = vector.broadcast %93 : vector<1x1xf32> to vector<16x1xf32>
    %95 = arith.addf %92, %94 : vector<16x1xf32>
    %96 = arith.negf %95 : vector<16x1xf32>
    %97 = math.exp %96 : vector<16x1xf32>
    %cst_55 = arith.constant 1.000000e+00 : f32
    %98 = vector.broadcast %cst_55 : f32 to vector<16x1xf32>
    %99 = arith.addf %98, %97 : vector<16x1xf32>
    %100 = arith.divf %98, %99 : vector<16x1xf32>
    %101 = vector.broadcast %81 : vector<1x32xf32> to vector<16x32xf32>
    %102 = vector.broadcast %100 : vector<16x1xf32> to vector<16x32xf32>
    %103 = arith.mulf %101, %102 : vector<16x32xf32>
    %104 = arith.mulf %19, %103 : vector<16x32xf32>
    %c0_56 = arith.constant 0 : index
    %c0_57 = arith.constant 0 : index
    %c0_58 = arith.constant 0 : index
    %105 = vector.load %arg17[%c0_56, %c0_57, %c0_58] : memref<1x16x32xf32, #tpu.memory_space<vmem>>, vector<1x16x32xf32>
    %106 = vector.shape_cast %105 : vector<1x16x32xf32> to vector<16x32xf32>
    %107 = vector.shape_cast %104 : vector<16x32xf32> to vector<1x16x32xf32>
    tpu.vector_store %arg17[%c0_56, %c0_57, %c0_58], %107 {strides = array<i32>} : memref<1x16x32xf32, #tpu.memory_space<vmem>>, vector<1x16x32xf32>,
    return
  }
  func.func @transform_0(%arg0: i32) -> (i32, i32, i32) {
    %c0_i32 = arith.constant 0 : i32
    %c0_i32_0 = arith.constant 0 : i32
    %c0_i32_1 = arith.constant 0 : i32
    return %arg0, %c0_i32, %c0_i32_0 : i32, i32, i32
  }
  func.func @transform_1(%arg0: i32) -> (i32, i32) {
    %c0_i32 = arith.constant 0 : i32
    %c0_i32_0 = arith.constant 0 : i32
    %c0_i32_1 = arith.constant 0 : i32
    return %c0_i32, %c0_i32_0 : i32, i32
  }
  func.func @transform_2(%arg0: i32) -> (i32, i32) {
    %c0_i32 = arith.constant 0 : i32
    %c0_i32_0 = arith.constant 0 : i32
    %c0_i32_1 = arith.constant 0 : i32
    return %c0_i32, %c0_i32_0 : i32, i32
  }
  func.func @transform_3(%arg0: i32) -> (i32, i32) {
    %c0_i32 = arith.constant 0 : i32
    %c0_i32_0 = arith.constant 0 : i32
    %c0_i32_1 = arith.constant 0 : i32
    return %c0_i32, %c0_i32_0 : i32, i32
  }
  func.func @transform_4(%arg0: i32) -> (i32, i32) {
    %c0_i32 = arith.constant 0 : i32
    %c0_i32_0 = arith.constant 0 : i32
    %c0_i32_1 = arith.constant 0 : i32
    return %c0_i32, %c0_i32_0 : i32, i32
  }
  func.func @transform_5(%arg0: i32) -> (i32, i32) {
    %c0_i32 = arith.constant 0 : i32
    %c0_i32_0 = arith.constant 0 : i32
    %c0_i32_1 = arith.constant 0 : i32
    return %c0_i32, %c0_i32_0 : i32, i32
  }
  func.func @transform_6(%arg0: i32) -> (i32, i32) {
    %c0_i32 = arith.constant 0 : i32
    %c0_i32_0 = arith.constant 0 : i32
    %c0_i32_1 = arith.constant 0 : i32
    return %c0_i32, %c0_i32_0 : i32, i32
  }
  func.func @transform_7(%arg0: i32) -> (i32, i32) {
    %c0_i32 = arith.constant 0 : i32
    %c0_i32_0 = arith.constant 0 : i32
    %c0_i32_1 = arith.constant 0 : i32
    return %c0_i32, %c0_i32_0 : i32, i32
  }
  func.func @transform_8(%arg0: i32) -> (i32, i32) {
    %c0_i32 = arith.constant 0 : i32
    %c0_i32_0 = arith.constant 0 : i32
    %c0_i32_1 = arith.constant 0 : i32
    return %c0_i32, %c0_i32_0 : i32, i32
  }
  func.func @transform_9(%arg0: i32) -> (i32, i32) {
    %c0_i32 = arith.constant 0 : i32
    %c0_i32_0 = arith.constant 0 : i32
    %c0_i32_1 = arith.constant 0 : i32
    return %c0_i32, %c0_i32_0 : i32, i32
  }
  func.func @transform_10(%arg0: i32) -> (i32, i32) {
    %c0_i32 = arith.constant 0 : i32
    %c0_i32_0 = arith.constant 0 : i32
    %c0_i32_1 = arith.constant 0 : i32
    return %c0_i32, %c0_i32_0 : i32, i32
  }
  func.func @transform_11(%arg0: i32) -> (i32, i32) {
    %c0_i32 = arith.constant 0 : i32
    %c0_i32_0 = arith.constant 0 : i32
    %c0_i32_1 = arith.constant 0 : i32
    return %c0_i32, %c0_i32_0 : i32, i32
  }
  func.func @transform_12(%arg0: i32) -> (i32, i32) {
    %c0_i32 = arith.constant 0 : i32
    %c0_i32_0 = arith.constant 0 : i32
    %c0_i32_1 = arith.constant 0 : i32
    return %c0_i32, %c0_i32_0 : i32, i32
  }
  func.func @transform_13(%arg0: i32) -> (i32, i32) {
    %c0_i32 = arith.constant 0 : i32
    %c0_i32_0 = arith.constant 0 : i32
    %c0_i32_1 = arith.constant 0 : i32
    return %c0_i32, %c0_i32_0 : i32, i32
  }
  func.func @transform_14(%arg0: i32) -> (i32, i32) {
    %c0_i32 = arith.constant 0 : i32
    %c0_i32_0 = arith.constant 0 : i32
    %c0_i32_1 = arith.constant 0 : i32
    return %c0_i32, %c0_i32_0 : i32, i32
  }
  func.func @transform_15(%arg0: i32) -> (i32, i32) {
    %c0_i32 = arith.constant 0 : i32
    %c0_i32_0 = arith.constant 0 : i32
    %c0_i32_1 = arith.constant 0 : i32
    return %c0_i32, %c0_i32_0 : i32, i32
  }
  func.func @transform_16(%arg0: i32) -> (i32, i32, i32) {
    %c0_i32 = arith.constant 0 : i32
    %c0_i32_0 = arith.constant 0 : i32
    %c0_i32_1 = arith.constant 0 : i32
    return %arg0, %c0_i32, %c0_i32_0 : i32, i32, i32
  }
}

</mosaic_0001>

<llo_original>
// kernel: biattn_mlp_forward.1
$region0: #{biattn_mlp_forward.1}
  #allocation0 [shape = 'u32[]', space=smem, size = 0x4, offset = 0x4, fixed_abs, tag = 'smem constant byte address 0x4 - core index']
  #allocation1 [shape = 'u32[72,128]{1,0:T(1,128)}', space=vmem, size = 0x9000, scoped, tag = 'internal scratch']
  #allocation2 [shape = 'f32[1,1]{1,0:T(1,128)S(1)}', space=vmem, size = 0x200, scoped, tag = 'scoped memory for biattn_mlp_forward.1']
  %s0 = inlined_call_operand.vmem [shape: f32[2,16,32], index: 0, kind: input, shape index: {}]
  %s1 = inlined_call_operand.vmem [shape: f32[32,128], index: 1, kind: input, shape index: {}]
  %s2 = inlined_call_operand.vmem [shape: f32[1,128], index: 2, kind: input, shape index: {}]
  %s3 = inlined_call_operand.vmem [shape: f32[128,32], index: 3, kind: input, shape index: {}]
  %s4 = inlined_call_operand.vmem [shape: f32[1,32], index: 4, kind: input, shape index: {}]
  %s5 = inlined_call_operand.vmem [shape: f32[1,32], index: 5, kind: input, shape index: {}]
  %s6 = inlined_call_operand.vmem [shape: f32[1,32], index: 6, kind: input, shape index: {}]
  %s7 = inlined_call_operand.vmem [shape: f32[32,8], index: 7, kind: input, shape index: {}]
  %s8 = inlined_call_operand.vmem [shape: f32[1,8], index: 8, kind: input, shape index: {}]
  %s9 = inlined_call_operand.vmem [shape: f32[32,8], index: 9, kind: input, shape index: {}]
  %s10 = inlined_call_operand.vmem [shape: f32[1,8], index: 10, kind: input, shape index: {}]
  %s11 = inlined_call_operand.vmem [shape: f32[8,32], index: 11, kind: input, shape index: {}]
  %s12 = inlined_call_operand.vmem [shape: f32[1,32], index: 12, kind: input, shape index: {}]
  %s13 = inlined_call_operand.vmem [shape: f32[1,8], index: 13, kind: input, shape index: {}]
  %s14 = inlined_call_operand.vmem [shape: f32[1,8], index: 14, kind: input, shape index: {}]
  %s15 = inlined_call_operand.<no memory space> [shape: f32[1,1], index: 15, kind: input, shape index: {}]
  %s16 = inlined_call_operand.hbm [shape: f32[2,16,32], index: 16, kind: output, shape index: {}]
  %s17 = sld [smem:[#allocation0]]
  $region97: #{biattn_mlp_forward.1} parent=0
    _
  %s19 = ssub.s32 1, %s17
  %s20 = scalar_select 0, %s19, %s17
  %v21 = vstv %s15
  %22 = vst [vmem:[#allocation2] sm:$0x1] %v21
  $region1: #{biattn_mlp_forward.1} parent=0
    #allocation3 [shape = 'u8[16384]{0}', space=vmem, size = 0x4000, scoped, tag = 'output window, operand 0']
    #allocation4 [shape = 's32[2]{0}', space=sflag, size = 0x8, scoped, tag = 'scoped memory for biattn_mlp_forward.1']
    %23 = vsyncpa [#allocation4], 0
    %s24 = scalar_lea.sflag [#allocation4], 1
    %25 = vsyncpa %s24, 0
    loop: start=0, step=1, limit=4
    $region2: #{biattn_mlp_forward.1} parent=1 // loop_pre_header
      _
    $region3: #{biattn_mlp_forward.1} parent=1 // loop_header
      %s27 = sphi 0, %s31
      %p28 = scmp.ge.s32.totalorder %s27, 4
      %s37 = sphi 0, %s39
      %s40 = sphi 0, %s37
      %s41 = sphi 0, %s40
      %s57 = sphi 0, %s41
      %s61 = sphi 0, %s61
      %s63 = sphi 0, %s61
      %s64 = sphi 0, %s63
      %s78 = sphi 0, %s64
      %s82 = sphi 0, %s82
      %s84 = sphi 0, %s82
      %s85 = sphi 0, %s84
      %s99 = sphi 0, %s85
      %s103 = sphi 0, %s103
      %s105 = sphi 0, %s103
      %s106 = sphi 0, %s105
      %s120 = sphi 0, %s106
      %s124 = sphi 0, %s124
      %s126 = sphi 0, %s124
      %s127 = sphi 0, %s126
      %s141 = sphi 0, %s127
      %s145 = sphi 0, %s145
      %s147 = sphi 0, %s145
      %s148 = sphi 0, %s147
      %s162 = sphi 0, %s148
      %s166 = sphi 0, %s166
      %s168 = sphi 0, %s166
      %s169 = sphi 0, %s168
      %s183 = sphi 0, %s169
      %s187 = sphi 0, %s187
      %s189 = sphi 0, %s187
      %s190 = sphi 0, %s189
      %s204 = sphi 0, %s190
      %s208 = sphi 0, %s208
      %s210 = sphi 0, %s208
      %s211 = sphi 0, %s210
      %s225 = sphi 0, %s211
      %s229 = sphi 0, %s229
      %s231 = sphi 0, %s229
      %s232 = sphi 0, %s231
      %s246 = sphi 0, %s232
      %s250 = sphi 0, %s250
      %s252 = sphi 0, %s250
      %s253 = sphi 0, %s252
      %s267 = sphi 0, %s253
      %s271 = sphi 0, %s271
      %s273 = sphi 0, %s271
      %s274 = sphi 0, %s273
      %s288 = sphi 0, %s274
      %s292 = sphi 0, %s292
      %s294 = sphi 0, %s292
      %s295 = sphi 0, %s294
      %s309 = sphi 0, %s295
      %s313 = sphi 0, %s313
      %s315 = sphi 0, %s313
      %s316 = sphi 0, %s315
      %s330 = sphi 0, %s316
      %s334 = sphi 0, %s334
      %s336 = sphi 0, %s334
      %s337 = sphi 0, %s336
      %s351 = sphi 0, %s337
      %s355 = sphi 0, %s355
      %s357 = sphi 0, %s355
      %s358 = sphi 0, %s357
      %s372 = sphi 0, %s358
      %s378 = sphi 0, %s380
      %s381 = sphi 0, %s378
      %s382 = sphi 0, %s381
      %s398 = sphi 0, %s382
    $region4: #{biattn_mlp_forward.1} parent=1 // loop_header_branch
      %30 = sbr.rel (%p28) target = $region8
    $region5: #{biattn_mlp_forward.1} parent=1 // loop_body
      %s32 = ssub.s32 %s27, 1
      %s33 = ssub.s32 %s27, 2
      %s34 = sadd.s32 %s27, 1
      %s35 = ssub.s32 %s27, %s34
      %p36 = scmp.eq.s32.totalorder %s35, 0
      %s38 = sadd.s32 %s37, 1
      %s39 = scalar_select %p36, %s37, %s38
      %p42 = pneg %p36
      %p43 = scmp.eq.s32.totalorder %s27, 1
      %p44 = por %p42, %p43
      %p45 = scmp.ne.s32.totalorder %s37, %s40
      %p46 = scmp.eq.s32.totalorder %s27, 0
      %p47 = por %p45, %p46
      %p48 = scmp.ne.s32.totalorder %s37, %s40
      %p49 = scmp.eq.s32.totalorder %s32, 1
      %p50 = por %p48, %p49
      %p51 = scmp.ne.s32.totalorder %s40, %s41
      %p52 = scmp.eq.s32.totalorder %s32, 0
      %p53 = por %p51, %p52
      %p54 = scmp.ne.s32.totalorder %s40, %s41
      %p55 = scmp.eq.s32.totalorder %s33, 1
      %p56 = por %p54, %p55
      %p58 = scmp.ne.s32.totalorder %s41, %s57
      %p59 = scmp.eq.s32.totalorder %s33, 0
      %p60 = por %p58, %p59
      %s62 = sadd.s32 %s61, 1
      %p65 = scmp.eq.s32.totalorder %s27, 1
      %p66 = scmp.ne.s32.totalorder %s61, %s63
      %p67 = scmp.eq.s32.totalorder %s27, 0
      %p68 = por %p66, %p67
      %p69 = scmp.ne.s32.totalorder %s61, %s63
      %p70 = scmp.eq.s32.totalorder %s32, 1
      %p71 = por %p69, %p70
      %p72 = scmp.ne.s32.totalorder %s63, %s64
      %p73 = scmp.eq.s32.totalorder %s32, 0
      %p74 = por %p72, %p73
      %p75 = scmp.ne.s32.totalorder %s63, %s64
      %p76 = scmp.eq.s32.totalorder %s33, 1
      %p77 = por %p75, %p76
      %p79 = scmp.ne.s32.totalorder %s64, %s78
      %p80 = scmp.eq.s32.totalorder %s33, 0
      %p81 = por %p79, %p80
      %s83 = sadd.s32 %s82, 1
      %p86 = scmp.eq.s32.totalorder %s27, 1
      %p87 = scmp.ne.s32.totalorder %s82, %s84
      %p88 = scmp.eq.s32.totalorder %s27, 0
      %p89 = por %p87, %p88
      %p90 = scmp.ne.s32.totalorder %s82, %s84
      %p91 = scmp.eq.s32.totalorder %s32, 1
      %p92 = por %p90, %p91
      %p93 = scmp.ne.s32.totalorder %s84, %s85
      %p94 = scmp.eq.s32.totalorder %s32, 0
      %p95 = por %p93, %p94
      %p96 = scmp.ne.s32.totalorder %s84, %s85
      %p97 = scmp.eq.s32.totalorder %s33, 1
      %p98 = por %p96, %p97
      %p100 = scmp.ne.s32.totalorder %s85, %s99
      %p101 = scmp.eq.s32.totalorder %s33, 0
      %p102 = por %p100, %p101
      %s104 = sadd.s32 %s103, 1
      %p107 = scmp.eq.s32.totalorder %s27, 1
      %p108 = scmp.ne.s32.totalorder %s103, %s105
      %p109 = scmp.eq.s32.totalorder %s27, 0
      %p110 = por %p108, %p109
      %p111 = scmp.ne.s32.totalorder %s103, %s105
      %p112 = scmp.eq.s32.totalorder %s32, 1
      %p113 = por %p111, %p112
      %p114 = scmp.ne.s32.totalorder %s105, %s106
      %p115 = scmp.eq.s32.totalorder %s32, 0
      %p116 = por %p114, %p115
      %p117 = scmp.ne.s32.totalorder %s105, %s106
      %p118 = scmp.eq.s32.totalorder %s33, 1
      %p119 = por %p117, %p118
      %p121 = scmp.ne.s32.totalorder %s106, %s120
      %p122 = scmp.eq.s32.totalorder %s33, 0
      %p123 = por %p121, %p122
      %s125 = sadd.s32 %s124, 1
      %p128 = scmp.eq.s32.totalorder %s27, 1
      %p129 = scmp.ne.s32.totalorder %s124, %s126
      %p130 = scmp.eq.s32.totalorder %s27, 0
      %p131 = por %p129, %p130
      %p132 = scmp.ne.s32.totalorder %s124, %s126
      %p133 = scmp.eq.s32.totalorder %s32, 1
      %p134 = por %p132, %p133
      %p135 = scmp.ne.s32.totalorder %s126, %s127
      %p136 = scmp.eq.s32.totalorder %s32, 0
      %p137 = por %p135, %p136
      %p138 = scmp.ne.s32.totalorder %s126, %s127
      %p139 = scmp.eq.s32.totalorder %s33, 1
      %p140 = por %p138, %p139
      %p142 = scmp.ne.s32.totalorder %s127, %s141
      %p143 = scmp.eq.s32.totalorder %s33, 0
      %p144 = por %p142, %p143
      %s146 = sadd.s32 %s145, 1
      %p149 = scmp.eq.s32.totalorder %s27, 1
      %p150 = scmp.ne.s32.totalorder %s145, %s147
      %p151 = scmp.eq.s32.totalorder %s27, 0
      %p152 = por %p150, %p151
      %p153 = scmp.ne.s32.totalorder %s145, %s147
      %p154 = scmp.eq.s32.totalorder %s32, 1
      %p155 = por %p153, %p154
      %p156 = scmp.ne.s32.totalorder %s147, %s148
      %p157 = scmp.eq.s32.totalorder %s32, 0
      %p158 = por %p156, %p157
      %p159 = scmp.ne.s32.totalorder %s147, %s148
      %p160 = scmp.eq.s32.totalorder %s33, 1
      %p161 = por %p159, %p160
      %p163 = scmp.ne.s32.totalorder %s148, %s162
      %p164 = scmp.eq.s32.totalorder %s33, 0
      %p165 = por %p163, %p164
      %s167 = sadd.s32 %s166, 1
      %p170 = scmp.eq.s32.totalorder %s27, 1
      %p171 = scmp.ne.s32.totalorder %s166, %s168
      %p172 = scmp.eq.s32.totalorder %s27, 0
      %p173 = por %p171, %p172
      %p174 = scmp.ne.s32.totalorder %s166, %s168
      %p175 = scmp.eq.s32.totalorder %s32, 1
      %p176 = por %p174, %p175
      %p177 = scmp.ne.s32.totalorder %s168, %s169
      %p178 = scmp.eq.s32.totalorder %s32, 0
      %p179 = por %p177, %p178
      %p180 = scmp.ne.s32.totalorder %s168, %s169
      %p181 = scmp.eq.s32.totalorder %s33, 1
      %p182 = por %p180, %p181
      %p184 = scmp.ne.s32.totalorder %s169, %s183
      %p185 = scmp.eq.s32.totalorder %s33, 0
      %p186 = por %p184, %p185
      %s188 = sadd.s32 %s187, 1
      %p191 = scmp.eq.s32.totalorder %s27, 1
      %p192 = scmp.ne.s32.totalorder %s187, %s189
      %p193 = scmp.eq.s32.totalorder %s27, 0
      %p194 = por %p192, %p193
      %p195 = scmp.ne.s32.totalorder %s187, %s189
      %p196 = scmp.eq.s32.totalorder %s32, 1
      %p197 = por %p195, %p196
      %p198 = scmp.ne.s32.totalorder %s189, %s190
      %p199 = scmp.eq.s32.totalorder %s32, 0
      %p200 = por %p198, %p199
      %p201 = scmp.ne.s32.totalorder %s189, %s190
      %p202 = scmp.eq.s32.totalorder %s33, 1
      %p203 = por %p201, %p202
      %p205 = scmp.ne.s32.totalorder %s190, %s204
      %p206 = scmp.eq.s32.totalorder %s33, 0
      %p207 = por %p205, %p206
      %s209 = sadd.s32 %s208, 1
      %p212 = scmp.eq.s32.totalorder %s27, 1
      %p213 = scmp.ne.s32.totalorder %s208, %s210
      %p214 = scmp.eq.s32.totalorder %s27, 0
      %p215 = por %p213, %p214
      %p216 = scmp.ne.s32.totalorder %s208, %s210
      %p217 = scmp.eq.s32.totalorder %s32, 1
      %p218 = por %p216, %p217
      %p219 = scmp.ne.s32.totalorder %s210, %s211
      %p220 = scmp.eq.s32.totalorder %s32, 0
      %p221 = por %p219, %p220
      %p222 = scmp.ne.s32.totalorder %s210, %s211
      %p223 = scmp.eq.s32.totalorder %s33, 1
      %p224 = por %p222, %p223
      %p226 = scmp.ne.s32.totalorder %s211, %s225
      %p227 = scmp.eq.s32.totalorder %s33, 0
      %p228 = por %p226, %p227
      %s230 = sadd.s32 %s229, 1
      %p233 = scmp.eq.s32.totalorder %s27, 1
      %p234 = scmp.ne.s32.totalorder %s229, %s231
      %p235 = scmp.eq.s32.totalorder %s27, 0
      %p236 = por %p234, %p235
      %p237 = scmp.ne.s32.totalorder %s229, %s231
      %p238 = scmp.eq.s32.totalorder %s32, 1
      %p239 = por %p237, %p238
      %p240 = scmp.ne.s32.totalorder %s231, %s232
      %p241 = scmp.eq.s32.totalorder %s32, 0
      %p242 = por %p240, %p241
      %p243 = scmp.ne.s32.totalorder %s231, %s232
      %p244 = scmp.eq.s32.totalorder %s33, 1
      %p245 = por %p243, %p244
      %p247 = scmp.ne.s32.totalorder %s232, %s246
      %p248 = scmp.eq.s32.totalorder %s33, 0
      %p249 = por %p247, %p248
      %s251 = sadd.s32 %s250, 1
      %p254 = scmp.eq.s32.totalorder %s27, 1
      %p255 = scmp.ne.s32.totalorder %s250, %s252
      %p256 = scmp.eq.s32.totalorder %s27, 0
      %p257 = por %p255, %p256
      %p258 = scmp.ne.s32.totalorder %s250, %s252
      %p259 = scmp.eq.s32.totalorder %s32, 1
      %p260 = por %p258, %p259
      %p261 = scmp.ne.s32.totalorder %s252, %s253
      %p262 = scmp.eq.s32.totalorder %s32, 0
      %p263 = por %p261, %p262
      %p264 = scmp.ne.s32.totalorder %s252, %s253
      %p265 = scmp.eq.s32.totalorder %s33, 1
      %p266 = por %p264, %p265
      %p268 = scmp.ne.s32.totalorder %s253, %s267
      %p269 = scmp.eq.s32.totalorder %s33, 0
      %p270 = por %p268, %p269
      %s272 = sadd.s32 %s271, 1
      %p275 = scmp.eq.s32.totalorder %s27, 1
      %p276 = scmp.ne.s32.totalorder %s271, %s273
      %p277 = scmp.eq.s32.totalorder %s27, 0
      %p278 = por %p276, %p277
      %p279 = scmp.ne.s32.totalorder %s271, %s273
      %p280 = scmp.eq.s32.totalorder %s32, 1
      %p281 = por %p279, %p280
      %p282 = scmp.ne.s32.totalorder %s273, %s274
      %p283 = scmp.eq.s32.totalorder %s32, 0
      %p284 = por %p282, %p283
      %p285 = scmp.ne.s32.totalorder %s273, %s274
      %p286 = scmp.eq.s32.totalorder %s33, 1
      %p287 = por %p285, %p286
      %p289 = scmp.ne.s32.totalorder %s274, %s288
      %p290 = scmp.eq.s32.totalorder %s33, 0
      %p291 = por %p289, %p290
      %s293 = sadd.s32 %s292, 1
      %p296 = scmp.eq.s32.totalorder %s27, 1
      %p297 = scmp.ne.s32.totalorder %s292, %s294
      %p298 = scmp.eq.s32.totalorder %s27, 0
      %p299 = por %p297, %p298
      %p300 = scmp.ne.s32.totalorder %s292, %s294
      %p301 = scmp.eq.s32.totalorder %s32, 1
      %p302 = por %p300, %p301
      %p303 = scmp.ne.s32.totalorder %s294, %s295
      %p304 = scmp.eq.s32.totalorder %s32, 0
      %p305 = por %p303, %p304
      %p306 = scmp.ne.s32.totalorder %s294, %s295
      %p307 = scmp.eq.s32.totalorder %s33, 1
      %p308 = por %p306, %p307
      %p310 = scmp.ne.s32.totalorder %s295, %s309
      %p311 = scmp.eq.s32.totalorder %s33, 0
      %p312 = por %p310, %p311
      %s314 = sadd.s32 %s313, 1
      %p317 = scmp.eq.s32.totalorder %s27, 1
      %p318 = scmp.ne.s32.totalorder %s313, %s315
      %p319 = scmp.eq.s32.totalorder %s27, 0
      %p320 = por %p318, %p319
      %p321 = scmp.ne.s32.totalorder %s313, %s315
      %p322 = scmp.eq.s32.totalorder %s32, 1
      %p323 = por %p321, %p322
      %p324 = scmp.ne.s32.totalorder %s315, %s316
      %p325 = scmp.eq.s32.totalorder %s32, 0
      %p326 = por %p324, %p325
      %p327 = scmp.ne.s32.totalorder %s315, %s316
      %p328 = scmp.eq.s32.totalorder %s33, 1
      %p329 = por %p327, %p328
      %p331 = scmp.ne.s32.totalorder %s316, %s330
      %p332 = scmp.eq.s32.totalorder %s33, 0
      %p333 = por %p331, %p332
      %s335 = sadd.s32 %s334, 1
      %p338 = scmp.eq.s32.totalorder %s27, 1
      %p339 = scmp.ne.s32.totalorder %s334, %s336
      %p340 = scmp.eq.s32.totalorder %s27, 0
      %p341 = por %p339, %p340
      %p342 = scmp.ne.s32.totalorder %s334, %s336
      %p343 = scmp.eq.s32.totalorder %s32, 1
      %p344 = por %p342, %p343
      %p345 = scmp.ne.s32.totalorder %s336, %s337
      %p346 = scmp.eq.s32.totalorder %s32, 0
      %p347 = por %p345, %p346
      %p348 = scmp.ne.s32.totalorder %s336, %s337
      %p349 = scmp.eq.s32.totalorder %s33, 1
      %p350 = por %p348, %p349
      %p352 = scmp.ne.s32.totalorder %s337, %s351
      %p353 = scmp.eq.s32.totalorder %s33, 0
      %p354 = por %p352, %p353
      %s356 = sadd.s32 %s355, 1
      %p359 = scmp.eq.s32.totalorder %s27, 1
      %p360 = scmp.ne.s32.totalorder %s355, %s357
      %p361 = scmp.eq.s32.totalorder %s27, 0
      %p362 = por %p360, %p361
      %p363 = scmp.ne.s32.totalorder %s355, %s357
      %p364 = scmp.eq.s32.totalorder %s32, 1
      %p365 = por %p363, %p364
      %p366 = scmp.ne.s32.totalorder %s357, %s358
      %p367 = scmp.eq.s32.totalorder %s32, 0
      %p368 = por %p366, %p367
      %p369 = scmp.ne.s32.totalorder %s357, %s358
      %p370 = scmp.eq.s32.totalorder %s33, 1
      %p371 = por %p369, %p370
      %p373 = scmp.ne.s32.totalorder %s358, %s372
      %p374 = scmp.eq.s32.totalorder %s33, 0
      %p375 = por %p373, %p374
      %s376 = ssub.s32 %s27, %s34
      %p377 = scmp.eq.s32.totalorder %s376, 0
      %s379 = sadd.s32 %s378, 1
      %s380 = scalar_select %p377, %s378, %s379
      %p383 = pneg %p377
      %p384 = scmp.eq.s32.totalorder %s27, 1
      %p385 = por %p383, %p384
      %p386 = scmp.ne.s32.totalorder %s378, %s381
      %p387 = scmp.eq.s32.totalorder %s27, 0
      %p388 = por %p386, %p387
      %p389 = scmp.ne.s32.totalorder %s378, %s381
      %p390 = scmp.eq.s32.totalorder %s32, 1
      %p391 = por %p389, %p390
      %p392 = scmp.ne.s32.totalorder %s381, %s382
      %p393 = scmp.eq.s32.totalorder %s32, 0
      %p394 = por %p392, %p393
      %p395 = scmp.ne.s32.totalorder %s381, %s382
      %p396 = scmp.eq.s32.totalorder %s33, 1
      %p397 = por %p395, %p396
      %p399 = scmp.ne.s32.totalorder %s382, %s398
      %p400 = scmp.eq.s32.totalorder %s33, 0
      %p401 = por %p399, %p400
      %p402 = scmp.le.s32.totalorder 1, %s27
      %p403 = scmp.lt.s32.totalorder %s27, 3
      %p404 = pnand %p402, %p403
      %p405 = pneg %p404
      // Predicated region
      $region9: #{biattn_mlp_forward.1} parent=5 // pred_check
        _
      $region10: #{biattn_mlp_forward.1} parent=5 // pred_check_branch
        %407 = sbr.rel (%p404) target = $region12
      $region11: #{biattn_mlp_forward.1} parent=5 // pred_region
        %s408 = ssub.s32 %s27, 1
        // Predicated region
        $region13: #{biattn_mlp_forward.1} parent=11 // pred_check
          %p409 = pneg %p74
        $region14: #{biattn_mlp_forward.1} parent=11 // pred_check_branch
          %411 = sbr.rel (%p409) target = $region16
        $region15: #{biattn_mlp_forward.1} parent=11 // pred_region
          _
        $region16: #{biattn_mlp_forward.1} parent=11 // pred_fallthru
          _
        // Predicated region
        $region17: #{biattn_mlp_forward.1} parent=11 // pred_check
          %p412 = pneg %p95
        $region18: #{biattn_mlp_forward.1} parent=11 // pred_check_branch
          %414 = sbr.rel (%p412) target = $region20
        $region19: #{biattn_mlp_forward.1} parent=11 // pred_region
          _
        $region20: #{biattn_mlp_forward.1} parent=11 // pred_fallthru
          _
        // Predicated region
        $region21: #{biattn_mlp_forward.1} parent=11 // pred_check
          %p415 = pneg %p116
        $region22: #{biattn_mlp_forward.1} parent=11 // pred_check_branch
          %417 = sbr.rel (%p415) target = $region24
        $region23: #{biattn_mlp_forward.1} parent=11 // pred_region
          _
        $region24: #{biattn_mlp_forward.1} parent=11 // pred_fallthru
          _
        // Predicated region
        $region25: #{biattn_mlp_forward.1} parent=11 // pred_check
          %p418 = pneg %p137
        $region26: #{biattn_mlp_forward.1} parent=11 // pred_check_branch
          %420 = sbr.rel (%p418) target = $region28
        $region27: #{biattn_mlp_forward.1} parent=11 // pred_region
          _
        $region28: #{biattn_mlp_forward.1} parent=11 // pred_fallthru
          _
        // Predicated region
        $region29: #{biattn_mlp_forward.1} parent=11 // pred_check
          %p421 = pneg %p158
        $region30: #{biattn_mlp_forward.1} parent=11 // pred_check_branch
          %423 = sbr.rel (%p421) target = $region32
        $region31: #{biattn_mlp_forward.1} parent=11 // pred_region
          _
        $region32: #{biattn_mlp_forward.1} parent=11 // pred_fallthru
          _
        // Predicated region
        $region33: #{biattn_mlp_forward.1} parent=11 // pred_check
          %p424 = pneg %p179
        $region34: #{biattn_mlp_forward.1} parent=11 // pred_check_branch
          %426 = sbr.rel (%p424) target = $region36
        $region35: #{biattn_mlp_forward.1} parent=11 // pred_region
          _
        $region36: #{biattn_mlp_forward.1} parent=11 // pred_fallthru
          _
        // Predicated region
        $region37: #{biattn_mlp_forward.1} parent=11 // pred_check
          %p427 = pneg %p200
        $region38: #{biattn_mlp_forward.1} parent=11 // pred_check_branch
          %429 = sbr.rel (%p427) target = $region40
        $region39: #{biattn_mlp_forward.1} parent=11 // pred_region
          _
        $region40: #{biattn_mlp_forward.1} parent=11 // pred_fallthru
          _
        // Predicated region
        $region41: #{biattn_mlp_forward.1} parent=11 // pred_check
          %p430 = pneg %p221
        $region42: #{biattn_mlp_forward.1} parent=11 // pred_check_branch
          %432 = sbr.rel (%p430) target = $region44
        $region43: #{biattn_mlp_forward.1} parent=11 // pred_region
          _
        $region44: #{biattn_mlp_forward.1} parent=11 // pred_fallthru
          _
        // Predicated region
        $region45: #{biattn_mlp_forward.1} parent=11 // pred_check
          %p433 = pneg %p242
        $region46: #{biattn_mlp_forward.1} parent=11 // pred_check_branch
          %435 = sbr.rel (%p433) target = $region48
        $region47: #{biattn_mlp_forward.1} parent=11 // pred_region
          _
        $region48: #{biattn_mlp_forward.1} parent=11 // pred_fallthru
          _
        // Predicated region
        $region49: #{biattn_mlp_forward.1} parent=11 // pred_check
          %p436 = pneg %p263
        $region50: #{biattn_mlp_forward.1} parent=11 // pred_check_branch
          %438 = sbr.rel (%p436) target = $region52
        $region51: #{biattn_mlp_forward.1} parent=11 // pred_region
          _
        $region52: #{biattn_mlp_forward.1} parent=11 // pred_fallthru
          _
        // Predicated region
        $region53: #{biattn_mlp_forward.1} parent=11 // pred_check
          %p439 = pneg %p284
        $region54: #{biattn_mlp_forward.1} parent=11 // pred_check_branch
          %441 = sbr.rel (%p439) target = $region56
        $region55: #{biattn_mlp_forward.1} parent=11 // pred_region
          _
        $region56: #{biattn_mlp_forward.1} parent=11 // pred_fallthru
          _
        // Predicated region
        $region57: #{biattn_mlp_forward.1} parent=11 // pred_check
          %p442 = pneg %p305
        $region58: #{biattn_mlp_forward.1} parent=11 // pred_check_branch
          %444 = sbr.rel (%p442) target = $region60
        $region59: #{biattn_mlp_forward.1} parent=11 // pred_region
          _
        $region60: #{biattn_mlp_forward.1} parent=11 // pred_fallthru
          _
        // Predicated region
        $region61: #{biattn_mlp_forward.1} parent=11 // pred_check
          %p445 = pneg %p326
        $region62: #{biattn_mlp_forward.1} parent=11 // pred_check_branch
          %447 = sbr.rel (%p445) target = $region64
        $region63: #{biattn_mlp_forward.1} parent=11 // pred_region
          _
        $region64: #{biattn_mlp_forward.1} parent=11 // pred_fallthru
          _
        // Predicated region
        $region65: #{biattn_mlp_forward.1} parent=11 // pred_check
          %p448 = pneg %p347
        $region66: #{biattn_mlp_forward.1} parent=11 // pred_check_branch
          %450 = sbr.rel (%p448) target = $region68
        $region67: #{biattn_mlp_forward.1} parent=11 // pred_region
          _
        $region68: #{biattn_mlp_forward.1} parent=11 // pred_fallthru
          _
        // Predicated region
        $region69: #{biattn_mlp_forward.1} parent=11 // pred_check
          %p451 = pneg %p368
        $region70: #{biattn_mlp_forward.1} parent=11 // pred_check_branch
          %453 = sbr.rel (%p451) target = $region72
        $region71: #{biattn_mlp_forward.1} parent=11 // pred_region
          _
        $region72: #{biattn_mlp_forward.1} parent=11 // pred_fallthru
          _
      $region12: #{biattn_mlp_forward.1} parent=5 // pred_fallthru
        _
      %p454 = scmp.lt.s32.totalorder %s27, 2
      // Predicated region
      $region73: #{biattn_mlp_forward.1} parent=5 // pred_check
        %p455 = pneg %p454
      $region74: #{biattn_mlp_forward.1} parent=5 // pred_check_branch
        %457 = sbr.rel (%p455) target = $region76
      $region75: #{biattn_mlp_forward.1} parent=5 // pred_region
        // Predicated region
        $region77: #{biattn_mlp_forward.1} parent=75 // pred_check
          %p458 = pneg %p47
        $region78: #{biattn_mlp_forward.1} parent=75 // pred_check_branch
          %460 = sbr.rel (%p458) target = $region80
        $region79: #{biattn_mlp_forward.1} parent=75 // pred_region
          %p461 = scmp.lt.s32.totalorder %s27, 1
          %s462 = scalar_select %p461, %s27, 1
          %s463 = smul.addr %s462, 2
          %s464 = smul.addr %s463, 8
          %s465 = scalar_lea.vmem %s0, %s464
        $region80: #{biattn_mlp_forward.1} parent=75 // pred_fallthru
          _
      $region76: #{biattn_mlp_forward.1} parent=5 // pred_fallthru
        _
      %p466 = scmp.le.s32.totalorder 1, %s27
      %p467 = scmp.lt.s32.totalorder %s27, 3
      %p468 = pnand %p466, %p467
      %p469 = pneg %p468
      // Predicated region
      $region81: #{biattn_mlp_forward.1} parent=5 // pred_check
        _
      $region82: #{biattn_mlp_forward.1} parent=5 // pred_check_branch
        %471 = sbr.rel (%p468) target = $region84
      $region83: #{biattn_mlp_forward.1} parent=5 // pred_region
        %s472 = ssub.s32 %s27, 1
        %p473 = scmp.lt.s32.totalorder %s32, 1
        %s474 = scalar_select %p473, %s32, 1
        %s475 = smul.addr %s474, 2
        %s476 = smul.addr %s475, 8
        %s477 = scalar_lea.vmem %s0, %s476
        %p478 = pneg %p53
        %p479 = pneg %p50
        %p480 = pneg %p74
        %p481 = pneg %p71
        %p482 = pneg %p95
        %p483 = pneg %p92
        %p484 = pneg %p116
        %p485 = pneg %p113
        %p486 = pneg %p137
        %p487 = pneg %p134
        %p488 = pneg %p158
        %p489 = pneg %p155
        %p490 = pneg %p179
        %p491 = pneg %p176
        %p492 = pneg %p200
        %p493 = pneg %p197
        %p494 = pneg %p221
        %p495 = pneg %p218
        %p496 = pneg %p242
        %p497 = pneg %p239
        %p498 = pneg %p263
        %p499 = pneg %p260
        %p500 = pneg %p284
        %p501 = pneg %p281
        %p502 = pneg %p305
        %p503 = pneg %p302
        %p504 = pneg %p326
        %p505 = pneg %p323
        %p506 = pneg %p347
        %p507 = pneg %p344
        %p508 = pneg %p368
        %p509 = pneg %p365
        %p510 = pneg %p394
        %p511 = pneg %p391
        %s512 = sand.u32 %s381, 1
        %s513 = scalar_lea.sflag [#allocation4], %s512
        %s514 = sand.u32 %s381, 1
        %s515 = smul.addr %s514, 16
        %s516 = scalar_lea.vmem [#allocation3], %s515
        %p517 = scmp.lt.s32.totalorder %s32, 1
        %s518 = scalar_select %p517, %s32, 1
        %s519 = smul.addr %s518, 2
        %s520 = smul.addr %s519, 8
        %s521 = scalar_lea.vmem %s0, %s520
        %v522 = vld [vmem:[%s521] sm:$0xff]
        %v523 = vld [vmem:[%s521 + $0x8] sm:$0xff]
        %v524 = vld [vmem:[%s1] sm:$0xff]
        %v525 = vld [vmem:[%s1 + $0x8] sm:$0xff]
        %v526 = vld [vmem:[%s1 + $0x10] sm:$0xff]
        %v527 = vld [vmem:[%s1 + $0x18] sm:$0xff]
        %v528 = vld [vmem:[%s2] sm:$0x1]
        %v530 = vperm.slane %v528, 0
        %vm532 = vcmask 261120
        %v534 = vsel %vm532, %v522, 0
        %v537 = vsel %vm532, %v523, 0
        %539 = vmatpush.msra.mxu0 0.0
        %540 = vmatpush.msra.mxu0 0.0
        %541 = vmatpush.msra.mxu0 0.0
        %542 = vmatpush.msra.mxu0 0.0
        %543 = vmatpush.msra.mxu0 0.0
        %544 = vmatpush.msra.mxu0 0.0
        %545 = vmatpush.msra.mxu0 0.0
        %546 = vmatpush.msra.mxu0 0.0
        %547 = vmatpush.msra.mxu0 0.0
        %548 = vmatpush.msra.mxu0 0.0
        %549 = vmatpush.msra.mxu0 0.0
        %550 = vmatpush.msra.mxu0 0.0
        %551 = vmatpush.msra.mxu0 %v527
        %552 = vmatpush.msra.mxu0 %v526
        %553 = vmatpush.msra.mxu0 %v525
        %554 = vmatpush.msra.mxu0 %v524
        %555 = vmatmul.f32.gmra.mxu0 %v534
        %v556 = vpop.f32.mrf.mxu0
        %v557 = vadd.f32 %v530, %v556
        %558 = vmatmul.f32.gmra.mxu0 %v537
        %v559 = vpop.f32.mrf.mxu0
        %v560 = vadd.f32 %v530, %v559
        %561 = vdwg.mxu0
        %v562 = vmul.f32 %v557, 0.5
        %v563 = vmul.f32 %v560, 0.5
        %v564 = vmul.f32 %v557, 0.70710677
        %v565 = vmul.f32 %v560, 0.70710677
        %v566 = vmul.f32 %v564, %v564
        %v567 = vmin.f32 16.0, %v566
        %v568 = vmul.f32 %v567, 2.1237322e-06
        %v569 = vadd.f32 %v568, 0.00028619796
        %v570 = vmul.f32 %v567, %v569
        %v571 = vadd.f32 %v570, 0.0036580483
        %v572 = vmul.f32 %v567, %v571
        %v573 = vadd.f32 %v572, 0.05243302
        %v574 = vmul.f32 %v567, %v573
        %v575 = vadd.f32 %v574, 0.18741608
        %v576 = vmul.f32 %v567, %v575
        %v577 = vadd.f32 %v576, 1.1283791
        %v578 = vmul.f32 %v564, %v577
        %v579 = vmul.f32 %v567, 3.8918573e-05
        %v580 = vadd.f32 %v579, 0.001143296
        %v581 = vmul.f32 %v567, %v580
        %v582 = vadd.f32 %v581, 0.014752088
        %v583 = vmul.f32 %v567, %v582
        %v584 = vadd.f32 %v583, 0.112945676
        %v585 = vmul.f32 %v567, %v584
        %v586 = vadd.f32 %v585, 0.4994258
        %v587 = vmul.f32 %v567, %v586
        %v588 = vadd.f32 %v587, 1.0
        %v589 = vrcp.pop %v588
        %v590 = vmul.f32 %v588, %v589
        %v591 = vsub.f32 1.0, %v590
        %v592 = vmul.f32 %v589, %v591
        %v593 = vadd.f32 %v589, %v592
        %vm594 = vweird.f32 %v588
        %vm595 = vweird.f32 %v589
        %vm596 = vmor %vm594, %vm595
        %v597 = vsel %vm596, %v589, %v593
        %v598 = vand.u32 2147483647, %v588
        %vm599 = vcmp.eq.f32.partialorder %v598, 8.507059e+37
        %v600 = vand.u32 %v588, 2147483648
        %v601 = vor.u32 1.1754944e-38, %v600
        %v602 = vsel %vm599, %v601, %v597
        %v603 = vmul.f32 %v578, %v602
        %v604 = vmin.f32 %v603, 1.0
        %v605 = vmax.f32 %v604, -1.0
        %v606 = vmul.f32 %v565, %v565
        %v607 = vmin.f32 16.0, %v606
        %v608 = vmul.f32 %v607, 2.1237322e-06
        %v609 = vadd.f32 %v608, 0.00028619796
        %v610 = vmul.f32 %v607, %v609
        %v611 = vadd.f32 %v610, 0.0036580483
        %v612 = vmul.f32 %v607, %v611
        %v613 = vadd.f32 %v612, 0.05243302
        %v614 = vmul.f32 %v607, %v613
        %v615 = vadd.f32 %v614, 0.18741608
        %v616 = vmul.f32 %v607, %v615
        %v617 = vadd.f32 %v616, 1.1283791
        %v618 = vmul.f32 %v565, %v617
        %v619 = vmul.f32 %v607, 3.8918573e-05
        %v620 = vadd.f32 %v619, 0.001143296
        %v621 = vmul.f32 %v607, %v620
        %v622 = vadd.f32 %v621, 0.014752088
        %v623 = vmul.f32 %v607, %v622
        %v624 = vadd.f32 %v623, 0.112945676
        %v625 = vmul.f32 %v607, %v624
        %v626 = vadd.f32 %v625, 0.4994258
        %v627 = vmul.f32 %v607, %v626
        %v628 = vadd.f32 %v627, 1.0
        %v629 = vrcp.pop %v628
        %v630 = vmul.f32 %v628, %v629
        %v631 = vsub.f32 1.0, %v630
        %v632 = vmul.f32 %v629, %v631
        %v633 = vadd.f32 %v629, %v632
        %vm634 = vweird.f32 %v628
        %vm635 = vweird.f32 %v629
        %vm636 = vmor %vm634, %vm635
        %v637 = vsel %vm636, %v629, %v633
        %v638 = vand.u32 2147483647, %v628
        %vm639 = vcmp.eq.f32.partialorder %v638, 8.507059e+37
        %v640 = vand.u32 %v628, 2147483648
        %v641 = vor.u32 1.1754944e-38, %v640
        %v642 = vsel %vm639, %v641, %v637
        %v643 = vmul.f32 %v618, %v642
        %v644 = vmin.f32 %v643, 1.0
        %v645 = vmax.f32 %v644, -1.0
        %v646 = vadd.f32 %v605, 1.0
        %v647 = vadd.f32 %v645, 1.0
        %v648 = vmul.f32 %v562, %v646
        %v649 = vmul.f32 %v563, %v647
        %v650 = vld [vmem:[%s3] sm:$0xff]
        %v651 = vld [vmem:[%s3 + $0x8] sm:$0xff]
        %v652 = vld [vmem:[%s3 + $0x10] sm:$0xff]
        %v653 = vld [vmem:[%s3 + $0x18] sm:$0xff]
        %v654 = vld [vmem:[%s3 + $0x20] sm:$0xff]
        %v655 = vld [vmem:[%s3 + $0x28] sm:$0xff]
        %v656 = vld [vmem:[%s3 + $0x30] sm:$0xff]
        %v657 = vld [vmem:[%s3 + $0x38] sm:$0xff]
        %v658 = vld [vmem:[%s3 + $0x40] sm:$0xff]
        %v659 = vld [vmem:[%s3 + $0x48] sm:$0xff]
        %v660 = vld [vmem:[%s3 + $0x50] sm:$0xff]
        %v661 = vld [vmem:[%s3 + $0x58] sm:$0xff]
        %v662 = vld [vmem:[%s3 + $0x60] sm:$0xff]
        %v663 = vld [vmem:[%s3 + $0x68] sm:$0xff]
        %v664 = vld [vmem:[%s3 + $0x70] sm:$0xff]
        %v665 = vld [vmem:[%s3 + $0x78] sm:$0xff]
        %v666 = vld [vmem:[%s4] sm:$0x1]
        %v668 = vperm.slane %v666, 0
        %670 = vmatpush.msra.mxu0 %v665
        %671 = vmatpush.msra.mxu0 %v664
        %672 = vmatpush.msra.mxu0 %v663
        %673 = vmatpush.msra.mxu0 %v662
        %674 = vmatpush.msra.mxu0 %v661
        %675 = vmatpush.msra.mxu0 %v660
        %676 = vmatpush.msra.mxu0 %v659
        %677 = vmatpush.msra.mxu0 %v658
        %678 = vmatpush.msra.mxu0 %v657
        %679 = vmatpush.msra.mxu0 %v656
        %680 = vmatpush.msra.mxu0 %v655
        %681 = vmatpush.msra.mxu0 %v654
        %682 = vmatpush.msra.mxu0 %v653
        %683 = vmatpush.msra.mxu0 %v652
        %684 = vmatpush.msra.mxu0 %v651
        %685 = vmatpush.msra.mxu0 %v650
        %686 = vmatmul.f32.gmra.mxu0 %v648
        %v687 = vpop.f32.mrf.mxu0
        %v688 = vadd.f32 %v668, %v687
        %689 = vmatmul.f32.gmra.mxu0 %v649
        %v690 = vpop.f32.mrf.mxu0
        %v691 = vadd.f32 %v668, %v690
        %692 = vdwg.mxu0
        %v693 = vsel %vm532, %v688, 0.0
        %694 = vadd.xlane.f32.xlu0 %v693
        %v695 = vpop.xlane.xlu0 %694
        %v696 = vsel %vm532, %v691, 0.0
        %697 = vadd.xlane.f32.xlu0 %v696
        %v698 = vpop.xlane.xlu0 %697
        %v699 = vrcp.pop 32.0
        %v700 = vmul.f32 32.0, %v699
        %v701 = vsub.f32 1.0, %v700
        %v702 = vmul.f32 %v699, %v701
        %v703 = vadd.f32 %v699, %v702
        %vm704 = vweird.f32 %v699
        %v705 = vsel %vm704, %v699, %v703
        %v706 = vmul.f32 %v695, %v705
        %v707 = vmul.f32 %v698, %v705
        %v708 = vsub.f32 %v688, %v706
        %v709 = vsub.f32 %v691, %v707
        %v710 = vmul.f32 %v708, %v708
        %v711 = vmul.f32 %v709, %v709
        %v712 = vsel %vm532, %v710, 0.0
        %713 = vadd.xlane.f32.xlu0 %v712
        %v714 = vpop.xlane.xlu0 %713
        %v715 = vsel %vm532, %v711, 0.0
        %716 = vadd.xlane.f32.xlu0 %v715
        %v717 = vpop.xlane.xlu0 %716
        %v718 = vmul.f32 %v714, %v705
        %v719 = vmul.f32 %v717, %v705
        %v720 = vadd.f32 %v718, 1e-05
        %v721 = vadd.f32 %v719, 1e-05
        %v722 = vrsqrt.pop %v720
        %v723 = vmul.f32 %v722, %v720
        %v724 = vmul.f32 %v723, %v722
        %v725 = vmul.f32 0.5, %v724
        %v726 = vsub.f32 1.5, %v725
        %v727 = vmul.f32 %v722, %v726
        %vm728 = vweird.f32 %v720
        %vm729 = vweird.f32 %v722
        %vm730 = vmor %vm728, %vm729
        %v731 = vsel %vm730, %v722, %v727
        %v732 = vrsqrt.pop %v721
        %v733 = vmul.f32 %v732, %v721
        %v734 = vmul.f32 %v733, %v732
        %v735 = vmul.f32 0.5, %v734
        %v736 = vsub.f32 1.5, %v735
        %v737 = vmul.f32 %v732, %v736
        %vm738 = vweird.f32 %v721
        %vm739 = vweird.f32 %v732
        %vm740 = vmor %vm738, %vm739
        %v741 = vsel %vm740, %v732, %v737
        %v742 = vmul.f32 %v708, %v731
        %v743 = vmul.f32 %v709, %v741
        %v744 = vld [vmem:[%s5] sm:$0x1]
        %v746 = vperm.slane %v744, 0
        %v748 = vmul.f32 %v742, %v746
        %v749 = vmul.f32 %v743, %v746
        %v750 = vld [vmem:[%s6] sm:$0x1]
        %v752 = vperm.slane %v750, 0
        %v754 = vadd.f32 %v748, %v752
        %v755 = vadd.f32 %v749, %v752
        %v756 = vsel %vm532, %v754, 0.0
        %v757 = vsel %vm532, %v755, 0.0
        %v758 = vadd.f32 %v756, %v757
        %v759 = vrot.slane %v758, 4
        %v760 = vadd.f32 %v758, %v759
        %v761 = vrot.slane %v760, 2
        %v762 = vadd.f32 %v760, %v761
        %v763 = vrot.slane %v762, 1
        %v764 = vadd.f32 %v762, %v763
        %v765 = vrcp.pop 16.0
        %v766 = vmul.f32 16.0, %v765
        %v767 = vsub.f32 1.0, %v766
        %v768 = vmul.f32 %v765, %v767
        %v769 = vadd.f32 %v765, %v768
        %vm770 = vweird.f32 %v765
        %v771 = vsel %vm770, %v765, %v769
        %v772 = vmul.f32 %v764, %v771
        %v773 = vld [vmem:[%s7] sm:$0xff]
        %v774 = vld [vmem:[%s7 + $0x8] sm:$0xff]
        %v775 = vld [vmem:[%s7 + $0x10] sm:$0xff]
        %v776 = vld [vmem:[%s7 + $0x18] sm:$0xff]
        %v777 = vld [vmem:[%s8] sm:$0x1]
        %v779 = vsel %vm532, %v772, 0
        %781 = vmatpush.msra.mxu0 0.0
        %782 = vmatpush.msra.mxu0 0.0
        %783 = vmatpush.msra.mxu0 0.0
        %784 = vmatpush.msra.mxu0 0.0
        %785 = vmatpush.msra.mxu0 0.0
        %786 = vmatpush.msra.mxu0 0.0
        %787 = vmatpush.msra.mxu0 0.0
        %788 = vmatpush.msra.mxu0 0.0
        %789 = vmatpush.msra.mxu0 0.0
        %790 = vmatpush.msra.mxu0 0.0
        %791 = vmatpush.msra.mxu0 0.0
        %792 = vmatpush.msra.mxu0 0.0
        %793 = vmatpush.msra.mxu0 %v776
        %794 = vmatpush.msra.mxu0 %v775
        %795 = vmatpush.msra.mxu0 %v774
        %796 = vmatpush.msra.mxu0 %v773
        %797 = vmatmul.f32.gmra.mxu0 %v779
        %v798 = vpop.f32.mrf.mxu0
        %v799 = vadd.f32 %v777, %v798
        %800 = vdwg.mxu0
        %v801 = vmul.f32 %v799, 0.5
        %v802 = vmul.f32 %v799, 0.70710677
        %v803 = vmul.f32 %v802, %v802
        %v804 = vmin.f32 16.0, %v803
        %v805 = vmul.f32 %v804, 2.1237322e-06
        %v806 = vadd.f32 %v805, 0.00028619796
        %v807 = vmul.f32 %v804, %v806
        %v808 = vadd.f32 %v807, 0.0036580483
        %v809 = vmul.f32 %v804, %v808
        %v810 = vadd.f32 %v809, 0.05243302
        %v811 = vmul.f32 %v804, %v810
        %v812 = vadd.f32 %v811, 0.18741608
        %v813 = vmul.f32 %v804, %v812
        %v814 = vadd.f32 %v813, 1.1283791
        %v815 = vmul.f32 %v802, %v814
        %v816 = vmul.f32 %v804, 3.8918573e-05
        %v817 = vadd.f32 %v816, 0.001143296
        %v818 = vmul.f32 %v804, %v817
        %v819 = vadd.f32 %v818, 0.014752088
        %v820 = vmul.f32 %v804, %v819
        %v821 = vadd.f32 %v820, 0.112945676
        %v822 = vmul.f32 %v804, %v821
        %v823 = vadd.f32 %v822, 0.4994258
        %v824 = vmul.f32 %v804, %v823
        %v825 = vadd.f32 %v824, 1.0
        %v826 = vrcp.pop %v825
        %v827 = vmul.f32 %v825, %v826
        %v828 = vsub.f32 1.0, %v827
        %v829 = vmul.f32 %v826, %v828
        %v830 = vadd.f32 %v826, %v829
        %vm831 = vweird.f32 %v825
        %vm832 = vweird.f32 %v826
        %vm833 = vmor %vm831, %vm832
        %v834 = vsel %vm833, %v826, %v830
        %v835 = vand.u32 2147483647, %v825
        %vm836 = vcmp.eq.f32.partialorder %v835, 8.507059e+37
        %v837 = vand.u32 %v825, 2147483648
        %v838 = vor.u32 1.1754944e-38, %v837
        %v839 = vsel %vm836, %v838, %v834
        %v840 = vmul.f32 %v815, %v839
        %v841 = vmin.f32 %v840, 1.0
        %v842 = vmax.f32 %v841, -1.0
        %v843 = vadd.f32 %v842, 1.0
        %v844 = vmul.f32 %v801, %v843
        %v845 = vld [vmem:[%s9] sm:$0xff]
        %v846 = vld [vmem:[%s9 + $0x8] sm:$0xff]
        %v847 = vld [vmem:[%s9 + $0x10] sm:$0xff]
        %v848 = vld [vmem:[%s9 + $0x18] sm:$0xff]
        %v849 = vld [vmem:[%s10] sm:$0x1]
        %v851 = vperm.slane %v849, 0
        %v854 = vsel %vm532, %v754, 0
        %v857 = vsel %vm532, %v755, 0
        %859 = vmatpush.msra.mxu0 0.0
        %860 = vmatpush.msra.mxu0 0.0
        %861 = vmatpush.msra.mxu0 0.0
        %862 = vmatpush.msra.mxu0 0.0
        %863 = vmatpush.msra.mxu0 0.0
        %864 = vmatpush.msra.mxu0 0.0
        %865 = vmatpush.msra.mxu0 0.0
        %866 = vmatpush.msra.mxu0 0.0
        %867 = vmatpush.msra.mxu0 0.0
        %868 = vmatpush.msra.mxu0 0.0
        %869 = vmatpush.msra.mxu0 0.0
        %870 = vmatpush.msra.mxu0 0.0
        %871 = vmatpush.msra.mxu0 %v848
        %872 = vmatpush.msra.mxu0 %v847
        %873 = vmatpush.msra.mxu0 %v846
        %874 = vmatpush.msra.mxu0 %v845
        %875 = vmatmul.f32.gmra.mxu0 %v854
        %v876 = vpop.f32.mrf.mxu0
        %v877 = vadd.f32 %v851, %v876
        %878 = vmatmul.f32.gmra.mxu0 %v857
        %v879 = vpop.f32.mrf.mxu0
        %v880 = vadd.f32 %v851, %v879
        %881 = vdwg.mxu0
        %v882 = vmul.f32 %v877, 0.5
        %v883 = vmul.f32 %v880, 0.5
        %v884 = vmul.f32 %v877, 0.70710677
        %v885 = vmul.f32 %v880, 0.70710677
        %v886 = vmul.f32 %v884, %v884
        %v887 = vmin.f32 16.0, %v886
        %v888 = vmul.f32 %v887, 2.1237322e-06
        %v889 = vadd.f32 %v888, 0.00028619796
        %v890 = vmul.f32 %v887, %v889
        %v891 = vadd.f32 %v890, 0.0036580483
        %v892 = vmul.f32 %v887, %v891
        %v893 = vadd.f32 %v892, 0.05243302
        %v894 = vmul.f32 %v887, %v893
        %v895 = vadd.f32 %v894, 0.18741608
        %v896 = vmul.f32 %v887, %v895
        %v897 = vadd.f32 %v896, 1.1283791
        %v898 = vmul.f32 %v884, %v897
        %v899 = vmul.f32 %v887, 3.8918573e-05
        %v900 = vadd.f32 %v899, 0.001143296
        %v901 = vmul.f32 %v887, %v900
        %v902 = vadd.f32 %v901, 0.014752088
        %v903 = vmul.f32 %v887, %v902
        %v904 = vadd.f32 %v903, 0.112945676
        %v905 = vmul.f32 %v887, %v904
        %v906 = vadd.f32 %v905, 0.4994258
        %v907 = vmul.f32 %v887, %v906
        %v908 = vadd.f32 %v907, 1.0
        %v909 = vrcp.pop %v908
        %v910 = vmul.f32 %v908, %v909
        %v911 = vsub.f32 1.0, %v910
        %v912 = vmul.f32 %v909, %v911
        %v913 = vadd.f32 %v909, %v912
        %vm914 = vweird.f32 %v908
        %vm915 = vweird.f32 %v909
        %vm916 = vmor %vm914, %vm915
        %v917 = vsel %vm916, %v909, %v913
        %v918 = vand.u32 2147483647, %v908
        %vm919 = vcmp.eq.f32.partialorder %v918, 8.507059e+37
        %v920 = vand.u32 %v908, 2147483648
        %v921 = vor.u32 1.1754944e-38, %v920
        %v922 = vsel %vm919, %v921, %v917
        %v923 = vmul.f32 %v898, %v922
        %v924 = vmin.f32 %v923, 1.0
        %v925 = vmax.f32 %v924, -1.0
        %v926 = vmul.f32 %v885, %v885
        %v927 = vmin.f32 16.0, %v926
        %v928 = vmul.f32 %v927, 2.1237322e-06
        %v929 = vadd.f32 %v928, 0.00028619796
        %v930 = vmul.f32 %v927, %v929
        %v931 = vadd.f32 %v930, 0.0036580483
        %v932 = vmul.f32 %v927, %v931
        %v933 = vadd.f32 %v932, 0.05243302
        %v934 = vmul.f32 %v927, %v933
        %v935 = vadd.f32 %v934, 0.18741608
        %v936 = vmul.f32 %v927, %v935
        %v937 = vadd.f32 %v936, 1.1283791
        %v938 = vmul.f32 %v885, %v937
        %v939 = vmul.f32 %v927, 3.8918573e-05
        %v940 = vadd.f32 %v939, 0.001143296
        %v941 = vmul.f32 %v927, %v940
        %v942 = vadd.f32 %v941, 0.014752088
        %v943 = vmul.f32 %v927, %v942
        %v944 = vadd.f32 %v943, 0.112945676
        %v945 = vmul.f32 %v927, %v944
        %v946 = vadd.f32 %v945, 0.4994258
        %v947 = vmul.f32 %v927, %v946
        %v948 = vadd.f32 %v947, 1.0
        %v949 = vrcp.pop %v948
        %v950 = vmul.f32 %v948, %v949
        %v951 = vsub.f32 1.0, %v950
        %v952 = vmul.f32 %v949, %v951
        %v953 = vadd.f32 %v949, %v952
        %vm954 = vweird.f32 %v948
        %vm955 = vweird.f32 %v949
        %vm956 = vmor %vm954, %vm955
        %v957 = vsel %vm956, %v949, %v953
        %v958 = vand.u32 2147483647, %v948
        %vm959 = vcmp.eq.f32.partialorder %v958, 8.507059e+37
        %v960 = vand.u32 %v948, 2147483648
        %v961 = vor.u32 1.1754944e-38, %v960
        %v962 = vsel %vm959, %v961, %v957
        %v963 = vmul.f32 %v938, %v962
        %v964 = vmin.f32 %v963, 1.0
        %v965 = vmax.f32 %v964, -1.0
        %v966 = vadd.f32 %v925, 1.0
        %v967 = vadd.f32 %v965, 1.0
        %v968 = vmul.f32 %v882, %v966
        %v969 = vmul.f32 %v883, %v967
        %v970 = vld [vmem:[%s11] sm:$0xff]
        %v971 = vld [vmem:[%s12] sm:$0x1]
        %vm972 = vcmask 64512
        %v974 = vsel %vm972, %v844, 0
        %976 = vmatpush.msra.mxu0 0.0
        %977 = vmatpush.msra.mxu0 0.0
        %978 = vmatpush.msra.mxu0 0.0
        %979 = vmatpush.msra.mxu0 0.0
        %980 = vmatpush.msra.mxu0 0.0
        %981 = vmatpush.msra.mxu0 0.0
        %982 = vmatpush.msra.mxu0 0.0
        %983 = vmatpush.msra.mxu0 0.0
        %984 = vmatpush.msra.mxu0 0.0
        %985 = vmatpush.msra.mxu0 0.0
        %986 = vmatpush.msra.mxu0 0.0
        %987 = vmatpush.msra.mxu0 0.0
        %988 = vmatpush.msra.mxu0 0.0
        %989 = vmatpush.msra.mxu0 0.0
        %990 = vmatpush.msra.mxu0 0.0
        %991 = vmatpush.msra.mxu0 %v970
        %992 = vmatmul.f32.gmra.mxu0 %v974
        %v993 = vpop.f32.mrf.mxu0
        %v994 = vadd.f32 %v971, %v993
        %995 = vdwg.mxu0
        %v996 = vxor.u32 %v994, 2147483648
        %v997 = vmul.f32 %v996, 1.442695
        %v998 = vpow.pop %v997
        %v999 = vadd.f32 %v998, 1.0
        %v1000 = vrcp.pop %v999
        %v1001 = vmul.f32 %v999, %v1000
        %v1002 = vsub.f32 1.0, %v1001
        %v1003 = vmul.f32 %v1000, %v1002
        %v1004 = vadd.f32 %v1000, %v1003
        %vm1005 = vweird.f32 %v999
        %vm1006 = vweird.f32 %v1000
        %vm1007 = vmor %vm1005, %vm1006
        %v1008 = vsel %vm1007, %v1000, %v1004
        %v1009 = vand.u32 2147483647, %v999
        %vm1010 = vcmp.eq.f32.partialorder %v1009, 8.507059e+37
        %v1011 = vand.u32 %v999, 2147483648
        %v1012 = vor.u32 1.1754944e-38, %v1011
        %v1013 = vsel %vm1010, %v1012, %v1008
        %v1014 = vmul.f32 1.0, %v1013
        %v1015 = vld [vmem:[%s13] sm:$0x1]
        %v1017 = vperm.slane %v1015, 0
        %v1019 = vmul.f32 %v968, %v1017
        %v1020 = vmul.f32 %v969, %v1017
        %v1021 = vsel %vm972, %v1019, 0.0
        %1022 = vadd.xlane.f32.xlu0 %v1021
        %v1023 = vpop.xlane.xlu0 %1022
        %v1024 = vsel %vm972, %v1020, 0.0
        %1025 = vadd.xlane.f32.xlu0 %v1024
        %v1026 = vpop.xlane.xlu0 %1025
        %v1027 = vld [vmem:[%s14] sm:$0x1]
        %v1028 = vmul.f32 %v844, %v1027
        %vm1029 = vcmask 57344
        %v1030 = vsel %vm1029, %v1028, 0.0
        %1031 = vadd.xlane.f32.xlu0 %v1030
        %v1032 = vpop.xlane.xlu0 %1031
        %v1033 = vperm.slane %v1032, 0
        %v1034 = vadd.f32 %v1023, %v1033
        %v1035 = vadd.f32 %v1026, %v1033
        %v1036 = vld [vmem:[#allocation2] sm:$0x1]
        %v1038 = vperm.slane %v1036, 0
        %v1040 = vadd.f32 %v1034, %v1038
        %v1041 = vadd.f32 %v1035, %v1038
        %v1042 = vxor.u32 %v1040, 2147483648
        %v1043 = vxor.u32 %v1041, 2147483648
        %v1044 = vmul.f32 %v1042, 1.442695
        %v1045 = vpow.pop %v1044
        %v1046 = vmul.f32 %v1043, 1.442695
        %v1047 = vpow.pop %v1046
        %v1048 = vadd.f32 %v1045, 1.0
        %v1049 = vadd.f32 %v1047, 1.0
        %v1050 = vrcp.pop %v1048
        %v1051 = vmul.f32 %v1048, %v1050
        %v1052 = vsub.f32 1.0, %v1051
        %v1053 = vmul.f32 %v1050, %v1052
        %v1054 = vadd.f32 %v1050, %v1053
        %vm1055 = vweird.f32 %v1048
        %vm1056 = vweird.f32 %v1050
        %vm1057 = vmor %vm1055, %vm1056
        %v1058 = vsel %vm1057, %v1050, %v1054
        %v1059 = vand.u32 2147483647, %v1048
        %vm1060 = vcmp.eq.f32.partialorder %v1059, 8.507059e+37
        %v1061 = vand.u32 %v1048, 2147483648
        %v1062 = vor.u32 1.1754944e-38, %v1061
        %v1063 = vsel %vm1060, %v1062, %v1058
        %v1064 = vmul.f32 1.0, %v1063
        %v1065 = vrcp.pop %v1049
        %v1066 = vmul.f32 %v1049, %v1065
        %v1067 = vsub.f32 1.0, %v1066
        %v1068 = vmul.f32 %v1065, %v1067
        %v1069 = vadd.f32 %v1065, %v1068
        %vm1070 = vweird.f32 %v1049
        %vm1071 = vweird.f32 %v1065
        %vm1072 = vmor %vm1070, %vm1071
        %v1073 = vsel %vm1072, %v1065, %v1069
        %v1074 = vand.u32 2147483647, %v1049
        %vm1075 = vcmp.eq.f32.partialorder %v1074, 8.507059e+37
        %v1076 = vand.u32 %v1049, 2147483648
        %v1077 = vor.u32 1.1754944e-38, %v1076
        %v1078 = vsel %vm1075, %v1077, %v1073
        %v1079 = vmul.f32 1.0, %v1078
        %v1080 = vperm.slane %v1014, 0
        %1082 = vset.pattern.permute.xlu0 0
        %1083 = vperm.xlu0 %1082, %v1064
        %v1084 = vpop.permute.xlu0 %1083
        %1087 = vset.pattern.permute.xlu0 0
        %1088 = vperm.xlu0 %1087, %v1079
        %v1089 = vpop.permute.xlu0 %1088
        %v1091 = vmul.f32 %v1080, %v1084
        %v1092 = vmul.f32 %v1080, %v1089
        %v1093 = vmul.f32 %v688, %v1091
        %v1094 = vmul.f32 %v691, %v1092
        %1095 = vst.msk [vmem:[%s516] sm:$0xff] %vm532, %v1093
        %1096 = vst.msk [vmem:[%s516 + $0x8] sm:$0xff] %vm532, %v1094
        %s1097 = sand.u32 %s381, 1
        %s1098 = scalar_lea.sflag [#allocation4], %s1097
        %s1099 = sand.u32 %s381, 1
        %s1100 = smul.addr %s1099, 16
        %s1101 = scalar_lea.vmem [#allocation3], %s1100
        // Predicated region
        $region85: #{biattn_mlp_forward.1} parent=83 // pred_check
          %p1102 = pneg %p391
        $region86: #{biattn_mlp_forward.1} parent=83 // pred_check_branch
          %1104 = sbr.rel (%p1102) target = $region88
        $region87: #{biattn_mlp_forward.1} parent=83 // pred_region
          %1106 = vsyncadd %s1098, 0
          %s1107 = smul.addr %s32, 2
          %s1108 = smul.addr %s1107, 8
          %s1109 = scalar_lea.hbm %s16, %s1108
          %s1110 = sshll.u32 %s1101, 4
          %s1111 = int_to_ptr.vmem [resolvable:$true] %s1110
          %s1112 = sshll.u32 %s1109, 4
          %s1113 = int_to_ptr.hbm [resolvable:$true] %s1112
          %1118 = dma.vmem_to_hbm [thread:$0]  %s1111, 256, %s1113, %s1098, 128, 128, 8
        $region88: #{biattn_mlp_forward.1} parent=83 // pred_fallthru
          _
      $region84: #{biattn_mlp_forward.1} parent=5 // pred_fallthru
        _
      %p1119 = scmp.le.s32.totalorder 2, %s27
      // Predicated region
      $region89: #{biattn_mlp_forward.1} parent=5 // pred_check
        %p1120 = pneg %p1119
      $region90: #{biattn_mlp_forward.1} parent=5 // pred_check_branch
        %1122 = sbr.rel (%p1120) target = $region92
      $region91: #{biattn_mlp_forward.1} parent=5 // pred_region
        %s1123 = ssub.s32 %s27, 2
        // Predicated region
        $region93: #{biattn_mlp_forward.1} parent=91 // pred_check
          %p1124 = pneg %p397
        $region94: #{biattn_mlp_forward.1} parent=91 // pred_check_branch
          %1126 = sbr.rel (%p1124) target = $region96
        $region95: #{biattn_mlp_forward.1} parent=91 // pred_region
          %s1127 = sand.u32 %s382, 1
          %s1128 = scalar_lea.sflag [#allocation4], %s1127
          %s1129 = sand.u32 %s382, 1
          %s1130 = smul.addr %s1129, 16
          %s1131 = scalar_lea.vmem [#allocation3], %s1130
          %1133 = dma.done %s1128, 256
        $region96: #{biattn_mlp_forward.1} parent=91 // pred_fallthru
          _
      $region92: #{biattn_mlp_forward.1} parent=5 // pred_fallthru
        _
    $region6: #{biattn_mlp_forward.1} parent=1 // loop_footer
      %s31 = sadd.s32 1, %s27
    $region7: #{biattn_mlp_forward.1} parent=1 // loop_footer_branch
      %26 = sbr.rel target = $region3
    $region8: #{biattn_mlp_forward.1} parent=1 // loop_exit
      _
    %1134 = vsyncpa [#allocation4], 1
    %s1135 = scalar_lea.sflag [#allocation4], 1
    %1136 = vsyncpa %s1135, 1

</llo_original>
